<compile_context>
chip_gen: v7x
topology: tpu7x:2x2x1
jax: 0.10.0
libtpu: 0.0.40
codegen_flags: <defaults>
</compile_context>

<pallas_src>
import functools

import jax
import jax.numpy as jnp
import numpy as np
from jax.experimental import pallas as pl
from jax.experimental.pallas import tpu as pltpu


def _pos_enc_kernel(x_ref, emb_ref, o_ref, *, scale):
    # x_ref / o_ref: (B, tL) lane-dense tile.
    # emb_ref:       (1, tL) positional-embedding slab, broadcast over batch
    #                (cheap sublane broadcast on the VPU).
    o_ref[...] = x_ref[...] * scale + emb_ref[...]


def _pick_tile(total, batch, bytes_per_elem, target_bytes=2 * 1024 * 1024):
    """Largest multiple-of-128 divisor of `total` whose (batch, tile) slab fits target.

    Falls back to the full extent when `total` is not a multiple of 128 (still
    correct; stores are then masked at the ragged edge only).
    """
    if total % 128 != 0:
        return total
    max_elems = max(128, target_bytes // max(1, batch * bytes_per_elem))
    tl = min((max_elems // 128) * 128, total)
    while tl >= 128:
        if total % tl == 0:
            return tl
        tl -= 128
    return total


def positional_encoding_sine(x, emb_weight, d_model):
    """x: (B, S, D); emb_weight: (n_pos, D). Returns x*sqrt(d_model)+emb[:S] (eval mode)."""
    B, S, D = x.shape
    n_pos, De = emb_weight.shape
    assert De == D and S <= n_pos

    # Lane-dense layout: flatten trailing dims so the last dim is S*D.
    L = S * D
    x_flat = x.reshape(B, L)
    # pos = arange(S) gather == first S rows of the table.
    emb_flat = emb_weight[:S].reshape(1, L).astype(x.dtype)

    bytes_per_elem = jnp.dtype(x.dtype).itemsize
    tL = _pick_tile(L, B, bytes_per_elem)
    grid = (pl.cdiv(L, tL),)

    # Compile-time constant scale; no SMEM input needed.
    scale = float(np.sqrt(float(d_model)))
    kernel = functools.partial(_pos_enc_kernel, scale=scale)

    cost = pl.CostEstimate(
        flops=2 * B * L,                               # one mul + one add per element
        transcendentals=0,
        bytes_accessed=(2 * B * L + L) * bytes_per_elem,
    )

    out_flat = pl.pallas_call(
        kernel,
        out_shape=jax.ShapeDtypeStruct((B, L), x.dtype),
        grid_spec=pltpu.PrefetchScalarGridSpec(
            num_scalar_prefetch=0,
            grid=grid,
            in_specs=[
                pl.BlockSpec((B, tL), lambda l: (0, l)),   # x slab (all batch rows)
                pl.BlockSpec((1, tL), lambda l: (0, l)),   # positional-emb slab
            ],
            out_specs=pl.BlockSpec((B, tL), lambda l: (0, l)),
        ),
        compiler_params=pltpu.CompilerParams(
            dimension_semantics=("parallel",),             # megacore-shardable on v7x
            vmem_limit_bytes=32 * 1024 * 1024,             # well within v7x scoped VMEM
        ),
        cost_estimate=cost,
    )(x_flat, emb_flat)

    return out_flat.reshape(B, S, D)


if __name__ == "__main__":
    # Small shapes consistent with the module's forward.
    B, S, D = 2, 8, 32          # batch, seq_len, d_model
    N_POS = 16                  # embedding table rows (>= seq_len)
    DROPOUT_P = 0.1             # unused at eval time (identity)

    key = jax.random.PRNGKey(0)
    kx, ke = jax.random.split(key)
    x = jax.random.normal(kx, (B, S, D), dtype=jnp.float32)
    # Deterministic synthetic Embedding weights (nn.Embedding default ~ N(0,1)).
    emb_weight = jax.random.normal(ke, (N_POS, D), dtype=jnp.float32)

    out = positional_encoding_sine(x, emb_weight, D)
    out = jax.block_until_ready(out)

    # Reference check in plain JAX.
    ref = x * jnp.sqrt(jnp.float32(D)) + emb_weight[:S][None, :, :]
    assert out.shape == (B, S, D)
    assert jnp.allclose(out, ref, atol=1e-5, rtol=1e-5)

    print("KERNEL_OK")
</pallas_src>

<mosaic_0001>
module attributes {stable_mosaic.version = 11 : i64} {
  func.func @_pos_enc_kernel(%arg0: i32, %arg1: memref<2x256xf32, #tpu.memory_space<vmem>>, %arg2: memref<1x256xf32, #tpu.memory_space<vmem>>, %arg3: memref<2x256xf32, #tpu.memory_space<vmem>>) attributes {dimension_semantics = [#tpu.dimension_semantics<parallel>], iteration_bounds = array<i64: 1>, scalar_prefetch = 0 : i64, scratch_operands = 0 : i64, tpu.core_type = #tpu.core_type<tc>, window_params = [{transform_indices = @transform_0, window_bounds = array<i64: 2, 256>}, {transform_indices = @transform_1, window_bounds = array<i64: 1, 256>}, {transform_indices = @transform_2, window_bounds = array<i64: 2, 256>}]} {
    %c0 = arith.constant 0 : index
    %c0_0 = arith.constant 0 : index
    %0 = vector.load %arg1[%c0, %c0_0] : memref<2x256xf32, #tpu.memory_space<vmem>>, vector<2x256xf32>
    %cst = arith.constant 5.65685415 : f32
    %1 = vector.broadcast %cst : f32 to vector<2x256xf32>
    %2 = arith.mulf %0, %1 : vector<2x256xf32>
    %c0_1 = arith.constant 0 : index
    %c0_2 = arith.constant 0 : index
    %3 = vector.load %arg2[%c0_1, %c0_2] : memref<1x256xf32, #tpu.memory_space<vmem>>, vector<1x256xf32>
    %4 = vector.broadcast %3 : vector<1x256xf32> to vector<2x256xf32>
    %5 = arith.addf %2, %4 : vector<2x256xf32>
    %c0_3 = arith.constant 0 : index
    %c0_4 = arith.constant 0 : index
    %6 = vector.load %arg3[%c0_3, %c0_4] : memref<2x256xf32, #tpu.memory_space<vmem>>, vector<2x256xf32>
    tpu.vector_store %arg3[%c0_3, %c0_4], %5 {strides = array<i32>} : memref<2x256xf32, #tpu.memory_space<vmem>>, vector<2x256xf32>,
    return
  }
  func.func @transform_0(%arg0: i32) -> (i32, i32) {
    %c0_i32 = arith.constant 0 : i32
    %c0_i32_0 = arith.constant 0 : i32
    return %c0_i32, %arg0 : i32, i32
  }
  func.func @transform_1(%arg0: i32) -> (i32, i32) {
    %c0_i32 = arith.constant 0 : i32
    %c0_i32_0 = arith.constant 0 : i32
    return %c0_i32, %arg0 : i32, i32
  }
  func.func @transform_2(%arg0: i32) -> (i32, i32) {
    %c0_i32 = arith.constant 0 : i32
    %c0_i32_0 = arith.constant 0 : i32
    return %c0_i32, %arg0 : i32, i32
  }
}

</mosaic_0001>

<llo_original>
// kernel: tpu_custom_call.1
$region0: #{tpu_custom_call.1}
  #allocation0 [shape = 'u32[]', space=smem, size = 0x4, offset = 0x4, fixed_abs, tag = 'smem constant byte address 0x4 - core index']
  #allocation1 [shape = 'u32[144,128]{1,0:T(1,128)}', space=vmem, size = 0x12000, scoped, tag = 'internal scratch']
  %s0 = inlined_call_operand.hbm [shape: f32[2,256], index: 0, kind: input, shape index: {}]
  %s1 = inlined_call_operand.vmem [shape: f32[1,256], index: 1, kind: input, shape index: {}]
  %s2 = inlined_call_operand.hbm [shape: f32[2,256], index: 2, kind: output, shape index: {}]
  %s3 = sld [smem:[#allocation0]]
  $region22: #{tpu_custom_call.1} parent=0
    _
  %s5 = ssub.s32 1, %s3
  %s6 = scalar_select 0, %s5, %s3
  $region1: #{tpu_custom_call.1} parent=0
    #allocation2 [shape = 'u8[2048]{0}', space=vmem, size = 0x800, scoped, tag = 'input window, operand 0, single buffered']
    #allocation3 [shape = 's32[1]{0}', space=sflag, size = 0x4, scoped, tag = 'scoped memory for tpu_custom_call.1']
    #allocation4 [shape = 's32[1]{0}', space=sflag, size = 0x4, scoped, tag = 'scoped memory for tpu_custom_call.1']
    #allocation5 [shape = 'u8[2048]{0}', space=vmem, size = 0x800, scoped, tag = 'output window, operand 0, single buffered']
    %7 = vsyncpa [#allocation3], 0
    %8 = vsyncpa [#allocation4], 0
    // Predicated region
    $region2: #{tpu_custom_call.1} parent=1 // pred_check
      _
    $region3: #{tpu_custom_call.1} parent=1 // pred_check_branch
      %10 = sbr.rel (0) target = $region5
    $region4: #{tpu_custom_call.1} parent=1 // pred_region
      %s12 = ssub.s32 64, 64
      %13 = vsyncadd [#allocation3], %s12
      %s15 = sshll.u32 [#allocation2], 4
      %s16 = int_to_ptr.vmem [resolvable:$true] %s15
      %18 = dma.hbm_to_vmem [thread:$0]  %s0, 64, %s16, [#allocation3]
    $region5: #{tpu_custom_call.1} parent=1 // pred_fallthru
      _
    // Predicated region
    $region6: #{tpu_custom_call.1} parent=1 // pred_check
      _
    $region7: #{tpu_custom_call.1} parent=1 // pred_check_branch
      %20 = sbr.rel (0) target = $region9
    $region8: #{tpu_custom_call.1} parent=1 // pred_region
      _
    $region9: #{tpu_custom_call.1} parent=1 // pred_fallthru
      _
    // Predicated region
    $region10: #{tpu_custom_call.1} parent=1 // pred_check
      _
    $region11: #{tpu_custom_call.1} parent=1 // pred_check_branch
      %22 = sbr.rel (0) target = $region13
    $region12: #{tpu_custom_call.1} parent=1 // pred_region
      %23 = dma.done [#allocation3], 64
    $region13: #{tpu_custom_call.1} parent=1 // pred_fallthru
      _
    %v24 = vld [vmem:[#allocation2] sm:$0xf]
    %v25 = vmul.f32 %v24, 5.656854
    %v26 = vld [vmem:[%s1] sm:$0x3]
    %v28 = vlaneseq
    %v29 = vshrl.u32 %v28, 7
    %v30 = vsub.s32 0, %v29
    %v31 = vrot.slane %v26, %v30
    %v32 = vlaneseq
    %v33 = vshrl.u32 %v32, 7
    %v34 = vsub.s32 1, %v33
    %v35 = vrot.slane %v26, %v34
    %v36 = vcombine.low %v31, %v35
    %v38 = vunpack.c.l.s4 1983009808
    %v39 = vunpack.c.0.s8 %v38
    %v40 = vlaneseq
    %v41 = vshrl.u32 %v40, 7
    %v42 = vsub.s32 %v39, %v41
    %v43 = vrot.slane %v36, %v42
    %v45 = vadd.f32 %v25, %v43
    %46 = vst [vmem:[#allocation5] sm:$0xf] %v45
    // Predicated region
    $region14: #{tpu_custom_call.1} parent=1 // pred_check
      _
    $region15: #{tpu_custom_call.1} parent=1 // pred_check_branch
      %48 = sbr.rel (0) target = $region17
    $region16: #{tpu_custom_call.1} parent=1 // pred_region
      %s50 = ssub.s32 64, 64
      %51 = vsyncadd [#allocation4], %s50
      %s53 = sshll.u32 [#allocation5], 4
      %s54 = int_to_ptr.vmem [resolvable:$true] %s53
      %56 = dma.vmem_to_hbm [thread:$0]  %s54, 64, %s2, [#allocation4]
    $region17: #{tpu_custom_call.1} parent=1 // pred_fallthru
      _
    // Predicated region
    $region18: #{tpu_custom_call.1} parent=1 // pred_check
      _
    $region19: #{tpu_custom_call.1} parent=1 // pred_check_branch
      %58 = sbr.rel (0) target = $region21
    $region20: #{tpu_custom_call.1} parent=1 // pred_region
      %59 = dma.done [#allocation4], 64
    $region21: #{tpu_custom_call.1} parent=1 // pred_fallthru
      _
    %60 = vsyncpa [#allocation3], 1
    %61 = vsyncpa [#allocation4], 1

</llo_original>
